<compile_context>
chip_gen: v6e
topology: v6e:2x2x1
jax: 0.10.0
libtpu: 0.0.40
codegen_flags: <defaults>
</compile_context>

<pallas_src>
import functools

import jax
import jax.numpy as jnp
from jax.experimental import pallas as pl
from jax.experimental.pallas import tpu as pltpu


def _relu_kernel(x_ref, o_ref):
    # slope == 0: single vmax on the VPU.
    o_ref[...] = jnp.maximum(x_ref[...], 0)


def _leaky_relu_kernel(x_ref, o_ref, *, slope):
    x = x_ref[...]
    s = jnp.asarray(slope, dtype=x.dtype)
    o_ref[...] = jnp.where(x >= 0, x, s * x)


def pallas_relu(x: jax.Array, relu: float) -> jax.Array:
    """Matches torch ReLU module: LeakyReLU(relu) if relu > 0, ReLU if relu == 0."""
    slope = float(relu)
    orig_shape = x.shape
    orig_dtype = x.dtype
    total = 1
    for d in orig_shape:
        total *= d

    # Pick a wide, lane-dense last dim (multiple of 128) -> unmasked vst stores.
    lane_dim = 128
    for cand in (2048, 1024, 512, 256, 128):
        if total % cand == 0:
            lane_dim = cand
            break

    pad = (-total) % lane_dim
    flat = x.reshape(-1)
    if pad:
        # Only for awkward sizes not divisible by 128; costs one HBM copy.
        flat = jnp.pad(flat, (0, pad))
    rows = (total + pad) // lane_dim
    x2d = flat.reshape(rows, lane_dim)

    # ~4 MiB tiles: large enough to amortize per-step overhead, small enough
    # that double-buffered in+out (~4x tile) stays well inside the 32 MiB
    # scoped VMEM limit requested below (and v7x's 64 MiB physical VMEM).
    itemsize = jnp.dtype(orig_dtype).itemsize
    target_tile_bytes = 4 * 1024 * 1024
    if rows >= 8:
        max_rows_per_tile = max(8, (target_tile_bytes // (lane_dim * itemsize)) // 8 * 8)
        tile_rows = min(max_rows_per_tile, rows)
        # Keep at least 2 grid steps when there is enough data so both
        # TensorCores on v7x get work (no effect on single-TC v5e/v6e).
        if tile_rows >= rows and rows >= 16:
            tile_rows = max(8, (pl.cdiv(rows, 2) // 8) * 8)
    else:
        # Tiny input: second-to-last block dim == full array dim is always legal.
        tile_rows = rows

    grid = (pl.cdiv(rows, tile_rows),)

    kernel = (
        _relu_kernel
        if slope == 0.0
        else functools.partial(_leaky_relu_kernel, slope=slope)
    )

    out2d = pl.pallas_call(
        kernel,
        out_shape=jax.ShapeDtypeStruct((rows, lane_dim), orig_dtype),
        grid=grid,
        in_specs=[pl.BlockSpec((tile_rows, lane_dim), lambda i: (i, 0))],
        out_specs=pl.BlockSpec((tile_rows, lane_dim), lambda i: (i, 0)),
        compiler_params=pltpu.CompilerParams(
            dimension_semantics=("parallel",),
            vmem_limit_bytes=32 * 1024 * 1024,
        ),
    )(x2d)

    out = out2d.reshape(-1)
    if pad:
        out = out[:total]
    return out.reshape(orig_shape)


if __name__ == "__main__":
    key = jax.random.PRNGKey(0)
    x = jax.random.normal(key, (2, 4, 16, 16), dtype=jnp.float32)  # NCHW

    # ReLU case (relu == 0)
    y_relu = pallas_relu(x, relu=0.0)
    jax.block_until_ready(y_relu)
    assert jnp.allclose(y_relu, jnp.maximum(x, 0.0)), "ReLU mismatch"

    # LeakyReLU case (relu > 0), slope = 0.2
    y_leaky = pallas_relu(x, relu=0.2)
    jax.block_until_ready(y_leaky)
    assert jnp.allclose(y_leaky, jnp.where(x >= 0, x, 0.2 * x)), "LeakyReLU mismatch"

    print("KERNEL_OK")
</pallas_src>

<mosaic_0001>
module attributes {stable_mosaic.version = 11 : i64} {
  func.func @_relu_kernel(%arg0: i32, %arg1: memref<1x2048xf32, #tpu.memory_space<vmem>>, %arg2: memref<1x2048xf32, #tpu.memory_space<vmem>>) attributes {dimension_semantics = [#tpu.dimension_semantics<parallel>], iteration_bounds = array<i64: 1>, scalar_prefetch = 0 : i64, scratch_operands = 0 : i64, tpu.core_type = #tpu.core_type<tc>, window_params = [{transform_indices = @transform_0, window_bounds = array<i64: 1, 2048>}, {transform_indices = @transform_1, window_bounds = array<i64: 1, 2048>}]} {
    %c0 = arith.constant 0 : index
    %c0_0 = arith.constant 0 : index
    %0 = vector.load %arg1[%c0, %c0_0] : memref<1x2048xf32, #tpu.memory_space<vmem>>, vector<1x2048xf32>
    %cst = arith.constant 0.000000e+00 : f32
    %1 = vector.broadcast %cst : f32 to vector<1x2048xf32>
    %2 = arith.maximumf %0, %1 : vector<1x2048xf32>
    %c0_1 = arith.constant 0 : index
    %c0_2 = arith.constant 0 : index
    %3 = vector.load %arg2[%c0_1, %c0_2] : memref<1x2048xf32, #tpu.memory_space<vmem>>, vector<1x2048xf32>
    tpu.vector_store %arg2[%c0_1, %c0_2], %2 {strides = array<i32>} : memref<1x2048xf32, #tpu.memory_space<vmem>>, vector<1x2048xf32>,
    return
  }
  func.func @transform_0(%arg0: i32) -> (i32, i32) {
    %c0_i32 = arith.constant 0 : i32
    %c0_i32_0 = arith.constant 0 : i32
    return %arg0, %c0_i32 : i32, i32
  }
  func.func @transform_1(%arg0: i32) -> (i32, i32) {
    %c0_i32 = arith.constant 0 : i32
    %c0_i32_0 = arith.constant 0 : i32
    return %arg0, %c0_i32 : i32, i32
  }
}

</mosaic_0001>

<llo_original>
// kernel: tpu_custom_call.1
$region0: #{tpu_custom_call.1}
  #allocation0 [shape = 'u32[]', space=smem, size = 0x4, offset = 0x4, fixed_abs, tag = 'smem constant byte address 0x4 - core index']
  #allocation1 [shape = 'u32[144,128]{1,0:T(1,128)}', space=vmem, size = 0x12000, scoped, tag = 'internal scratch']
  %s0 = inlined_call_operand.hbm [shape: f32[1,2048], index: 0, kind: input, shape index: {}]
  %s1 = inlined_call_operand.hbm [shape: f32[1,2048], index: 1, kind: output, shape index: {}]
  %s2 = sld [smem:[#allocation0]]
  $region18: #{tpu_custom_call.1} parent=0
    _
  %s4 = ssub.s32 1, %s2
  %s5 = scalar_select 0, %s4, %s2
  $region1: #{tpu_custom_call.1} parent=0
    #allocation2 [shape = 'u8[8192]{0}', space=vmem, size = 0x2000, scoped, tag = 'input window, operand 0, single buffered']
    #allocation3 [shape = 's32[1]{0}', space=sflag, size = 0x4, scoped, tag = 'scoped memory for tpu_custom_call.1']
    #allocation4 [shape = 's32[1]{0}', space=sflag, size = 0x4, scoped, tag = 'scoped memory for tpu_custom_call.1']
    #allocation5 [shape = 'u8[8192]{0}', space=vmem, size = 0x2000, scoped, tag = 'output window, operand 0, single buffered']
    %6 = vsyncpa [#allocation3], 0
    %7 = vsyncpa [#allocation4], 0
    // Predicated region
    $region2: #{tpu_custom_call.1} parent=1 // pred_check
      _
    $region3: #{tpu_custom_call.1} parent=1 // pred_check_branch
      %9 = sbr.rel (0) target = $region5
    $region4: #{tpu_custom_call.1} parent=1 // pred_region
      %s11 = ssub.s32 256, 256
      %12 = vsyncadd [#allocation3], %s11
      %s14 = sshll.u32 [#allocation2], 4
      %s15 = int_to_ptr.vmem [resolvable:$true] %s14
      %17 = dma.hbm_to_vmem [thread:$0]  %s0, 256, %s15, [#allocation3]
    $region5: #{tpu_custom_call.1} parent=1 // pred_fallthru
      _
    // Predicated region
    $region6: #{tpu_custom_call.1} parent=1 // pred_check
      _
    $region7: #{tpu_custom_call.1} parent=1 // pred_check_branch
      %19 = sbr.rel (0) target = $region9
    $region8: #{tpu_custom_call.1} parent=1 // pred_region
      %20 = dma.done [#allocation3], 256
    $region9: #{tpu_custom_call.1} parent=1 // pred_fallthru
      _
    %v21 = vld [vmem:[#allocation2] sm:$0xff]
    %v22 = vld [vmem:[#allocation2 + $0x8] sm:$0xff]
    %v23 = vmax.f32 %v21, 0.0
    %v24 = vmax.f32 %v22, 0.0
    %25 = vst [vmem:[#allocation5] sm:$0xff] %v23
    %26 = vst [vmem:[#allocation5 + $0x8] sm:$0xff] %v24
    // Predicated region
    $region10: #{tpu_custom_call.1} parent=1 // pred_check
      _
    $region11: #{tpu_custom_call.1} parent=1 // pred_check_branch
      %28 = sbr.rel (0) target = $region13
    $region12: #{tpu_custom_call.1} parent=1 // pred_region
      %s30 = ssub.s32 256, 256
      %31 = vsyncadd [#allocation4], %s30
      %s33 = sshll.u32 [#allocation5], 4
      %s34 = int_to_ptr.vmem [resolvable:$true] %s33
      %36 = dma.vmem_to_hbm [thread:$0]  %s34, 256, %s1, [#allocation4]
    $region13: #{tpu_custom_call.1} parent=1 // pred_fallthru
      _
    // Predicated region
    $region14: #{tpu_custom_call.1} parent=1 // pred_check
      _
    $region15: #{tpu_custom_call.1} parent=1 // pred_check_branch
      %38 = sbr.rel (0) target = $region17
    $region16: #{tpu_custom_call.1} parent=1 // pred_region
      %39 = dma.done [#allocation4], 256
    $region17: #{tpu_custom_call.1} parent=1 // pred_fallthru
      _
    %40 = vsyncpa [#allocation3], 1
    %41 = vsyncpa [#allocation4], 1

</llo_original>
